<compile_context>
chip_gen: v7x
topology: tpu7x:2x2x1
jax: 0.10.0
libtpu: 0.0.40
codegen_flags: <defaults>
</compile_context>

<pallas_src>
import jax
import jax.numpy as jnp
from jax.experimental import pallas as pl
from jax.experimental.pallas import tpu as pltpu


# --------------------------------------------------------------------------- #
# Kernels
# --------------------------------------------------------------------------- #

def _make_onehot_kernel(vocab: int):
    """Fast path: table resident in VMEM, gather via one-hot MXU matmul."""

    def kernel(ids_ref, w_ref, out_ref):
        # ids_ref: (T, 1) int32 VMEM block of token ids
        # w_ref:   (vocab, d_model) full embedding table in VMEM (constant idx)
        # out_ref: (T, d_model) output block
        T = ids_ref.shape[0]
        ids = ids_ref[...]                                        # (T, 1)
        cols = jax.lax.broadcasted_iota(jnp.int32, (T, vocab), 1)  # (T, vocab)
        onehot = (ids == cols).astype(w_ref.dtype)
        acc = jnp.dot(onehot, w_ref[...], preferred_element_type=jnp.float32)
        out_ref[...] = acc.astype(out_ref.dtype)

    return kernel


def _make_dma_gather_kernel(block_tokens: int):
    """General path: table in HBM, per-row DMA gather into the output block."""
    T = block_tokens
    assert T % 8 == 0, "block_tokens must be a multiple of 8"

    def kernel(ids_ref, w_hbm_ref, out_ref, sem):
        # ids_ref:   (num_blocks, T) int32 in SMEM (scalar prefetch)
        # w_hbm_ref: (vocab, d_model) embedding table, left in HBM (pl.ANY)
        # out_ref:   (T, d_model) VMEM output block for this grid step
        # sem:       (1,) DMA semaphore shared by all row copies of this step
        blk = pl.program_id(0)

        # Issue all T row gathers.  The loop body is manually unrolled x8 so
        # the LLO scheduler can pipeline SMEM id reads + descriptor pushes.
        def issue8(j, carry):
            base = j * 8
            for u in range(8):
                t = base + u
                tok = ids_ref[blk, t]
                pltpu.make_async_copy(
                    w_hbm_ref.at[pl.ds(tok, 1), :],
                    out_ref.at[pl.ds(t, 1), :],
                    sem.at[0],
                ).start()
            return carry

        jax.lax.fori_loop(0, T // 8, issue8, 0)

        # Single aggregate wait.  DMA semaphores count bytes, so waiting once
        # with a descriptor sized for the whole (T, d_model) block drains
        # exactly the T x row_bytes signalled by the row copies above.
        # Invariant: every issued copy above is exactly one full row.
        pltpu.make_async_copy(out_ref, out_ref, sem.at[0]).wait()

    return kernel


# --------------------------------------------------------------------------- #
# Wrapper
# --------------------------------------------------------------------------- #

def _round_up(x: int, m: int) -> int:
    return -(-x // m) * m


def _vmem_limit_bytes() -> int:
    """Chip-aware scoped-VMEM request (v7x has only 64 MiB/TC vs 128 MiB)."""
    try:
        info = pltpu.get_tpu_info()
        phys = int(getattr(info, "vmem_capacity_bytes", 0)) or 64 * 2**20
    except Exception:
        phys = 64 * 2**20  # assume the smallest (v7x-class) if unknown
    if phys <= 64 * 2**20:       # v7x: 64 MiB per TensorCore
        return 48 * 2**20
    return 96 * 2**20            # v5e / v6e: 128 MiB physical


def embedding_lookup(token_ids: jax.Array, weight: jax.Array, *,
                     block_tokens: int | None = None,
                     use_vmem_table: bool | None = None) -> jax.Array:
    """Equivalent of `weight[token_ids]` (PyTorch Embedding.forward)."""
    orig_shape = token_ids.shape
    vocab, d_model = weight.shape

    ids_flat = jnp.clip(token_ids.reshape(-1).astype(jnp.int32), 0, vocab - 1)
    n_tokens = int(ids_flat.shape[0])
    if n_tokens == 0:
        return jnp.zeros((*orig_shape, d_model), weight.dtype)

    itemsize = jnp.dtype(weight.dtype).itemsize
    sub = max(8, 32 // itemsize)          # sublane multiple: 8 f32 / 16 bf16 / 32 int8
    vmem_limit = _vmem_limit_bytes()
    table_bytes = vocab * d_model * itemsize

    # ---- path selection ---------------------------------------------------
    if use_vmem_table is None:
        use_vmem_table = (
            jnp.issubdtype(weight.dtype, jnp.floating)
            and vocab <= 4096
            # the pipeline double-buffers the (constant-index) table block
            and 2 * table_bytes <= int(0.6 * vmem_limit)
        )

    # ---- block-size selection ----------------------------------------------
    if block_tokens is None:
        if use_vmem_table:
            # keep one-hot (T, vocab) + out blocks modest next to the table
            T = (vmem_limit // 4) // max(1, 2 * d_model * itemsize)
            T = min(256, T)
        else:
            # table never enters VMEM: give the double-buffered out block
            # roughly half the scoped budget, more in-flight row DMAs per step
            T = (vmem_limit // 2) // max(1, 2 * d_model * itemsize)
            T = min(1024, T)
        # make sure a 2-TensorCore chip (v7x) gets >= 2 grid blocks to shard
        if n_tokens > sub:
            T = min(T, _round_up(-(-n_tokens // 2), sub))
    else:
        T = int(block_tokens)

    T = max(sub, (T // sub) * sub)
    T = min(T, _round_up(n_tokens, sub))

    num_blocks = -(-n_tokens // T)
    n_pad = num_blocks * T
    if n_pad != n_tokens:
        ids_flat = jnp.concatenate(
            [ids_flat, jnp.zeros((n_pad - n_tokens,), jnp.int32)])

    cparams = pltpu.CompilerParams(
        dimension_semantics=("parallel",),
        vmem_limit_bytes=int(vmem_limit),
    )

    if use_vmem_table:
        # ---------------- fast path: VMEM table + one-hot MXU ----------------
        ids_2d = ids_flat.reshape(n_pad, 1)
        out_padded = pl.pallas_call(
            _make_onehot_kernel(vocab),
            grid=(num_blocks,),
            in_specs=[
                pl.BlockSpec((T, 1), lambda i: (i, 0)),
                pl.BlockSpec((vocab, d_model), lambda i: (0, 0)),  # resident
            ],
            out_specs=pl.BlockSpec((T, d_model), lambda i: (i, 0)),
            out_shape=jax.ShapeDtypeStruct((n_pad, d_model), weight.dtype),
            compiler_params=cparams,
        )(ids_2d, weight)
    else:
        # ---------------- general path: HBM row-DMA gather -------------------
        ids_blocked = ids_flat.reshape(num_blocks, T)
        grid_spec = pltpu.PrefetchScalarGridSpec(
            num_scalar_prefetch=1,
            grid=(num_blocks,),
            in_specs=[pl.BlockSpec(memory_space=pl.ANY)],   # table stays in HBM
            out_specs=pl.BlockSpec((T, d_model), lambda i, ids: (i, 0)),
            scratch_shapes=[pltpu.SemaphoreType.DMA((1,))],
        )
        out_padded = pl.pallas_call(
            _make_dma_gather_kernel(T),
            grid_spec=grid_spec,
            out_shape=jax.ShapeDtypeStruct((n_pad, d_model), weight.dtype),
            compiler_params=cparams,
        )(ids_blocked, weight)

    out = out_padded[:n_tokens] if n_pad != n_tokens else out_padded
    return out.reshape(*orig_shape, d_model)


def init_embedding_weight(key, num_embeddings: int, embedding_dim: int,
                          dtype=jnp.float32) -> jax.Array:
    # Matches torch.nn.init.trunc_normal_(std=1.0, a=-3, b=3): truncated
    # standard normal on [-3, 3].
    w = jax.random.truncated_normal(
        key, lower=-3.0, upper=3.0, shape=(num_embeddings, embedding_dim),
        dtype=jnp.float32)
    return w.astype(dtype)


# --------------------------------------------------------------------------- #
# Self-test
# --------------------------------------------------------------------------- #

if __name__ == "__main__":
    key = jax.random.PRNGKey(0)
    k_w1, k_id1, k_w2, k_id2, k_w3, k_id3 = jax.random.split(key, 6)

    # Case 1: small vocab, f32 -> VMEM-resident one-hot MXU fast path,
    # two token blocks (exercises the parallel grid axis).
    vocab1, d1, b1, s1 = 64, 128, 2, 8
    w1 = init_embedding_weight(k_w1, vocab1, d1)
    ids1 = jax.random.randint(k_id1, (b1, s1), 0, vocab1, dtype=jnp.int32)
    out1 = jax.block_until_ready(embedding_lookup(ids1, w1))
    assert out1.shape == (b1, s1, d1)
    assert out1.dtype == w1.dtype
    assert jnp.array_equal(out1, w1[ids1])

    # Case 2: force the HBM DMA-gather path (ragged tail, multi-block grid,
    # unrolled issue loop + single aggregate wait).
    vocab2, d2, b2, s2 = 300, 256, 3, 25   # 75 tokens -> padded token blocks
    w2 = init_embedding_weight(k_w2, vocab2, d2)
    ids2 = jax.random.randint(k_id2, (b2, s2), 0, vocab2, dtype=jnp.int32)
    out2 = jax.block_until_ready(embedding_lookup(ids2, w2, use_vmem_table=False))
    assert out2.shape == (b2, s2, d2)
    assert out2.dtype == w2.dtype
    assert jnp.array_equal(out2, w2[ids2])

    # Case 3: bf16 table -> fast path with 16-row sublane-aligned blocks.
    vocab3, d3, b3, s3 = 512, 128, 2, 12
    w3 = init_embedding_weight(k_w3, vocab3, d3, dtype=jnp.bfloat16)
    ids3 = jax.random.randint(k_id3, (b3, s3), 0, vocab3, dtype=jnp.int32)
    out3 = jax.block_until_ready(embedding_lookup(ids3, w3))
    assert out3.shape == (b3, s3, d3)
    assert out3.dtype == w3.dtype
    assert jnp.array_equal(out3, w3[ids3])

    print("KERNEL_OK")
</pallas_src>

<mosaic_0001>
module attributes {stable_mosaic.version = 11 : i64} {
  func.func @kernel(%arg0: i32, %arg1: memref<8x1xi32, #tpu.memory_space<vmem>>, %arg2: memref<64x128xf32, #tpu.memory_space<vmem>>, %arg3: memref<8x128xf32, #tpu.memory_space<vmem>>) attributes {dimension_semantics = [#tpu.dimension_semantics<parallel>], iteration_bounds = array<i64: 2>, scalar_prefetch = 0 : i64, scratch_operands = 0 : i64, tpu.core_type = #tpu.core_type<tc>, window_params = [{transform_indices = @transform_0, window_bounds = array<i64: 8, 1>}, {pipeline_mode = #tpu.pipeline_mode<synchronous>, transform_indices = @transform_1, window_bounds = array<i64: 64, 128>}, {transform_indices = @transform_2, window_bounds = array<i64: 8, 128>}]} {
    %c0 = arith.constant 0 : index
    %c0_0 = arith.constant 0 : index
    %0 = vector.load %arg1[%c0, %c0_0] : memref<8x1xi32, #tpu.memory_space<vmem>>, vector<8x1xi32>
    %1 = tpu.iota {dimensions = array<i32: 1>} : vector<8x64xi32>
    %2 = vector.broadcast %0 : vector<8x1xi32> to vector<8x64xi32>
    %3 = arith.cmpi eq, %2, %1 : vector<8x64xi32>
    %4 = arith.extui %3 : vector<8x64xi1> to vector<8x64xi32>
    %5 = arith.sitofp %4 : vector<8x64xi32> to vector<8x64xf32>
    %c0_1 = arith.constant 0 : index
    %c0_2 = arith.constant 0 : index
    %6 = vector.load %arg2[%c0_1, %c0_2] : memref<64x128xf32, #tpu.memory_space<vmem>>, vector<64x128xf32>
    %cst = arith.constant dense<0.000000e+00> : vector<8x128xf32>
    %7 = tpu.matmul %5, %6, %cst {dimension_numbers = #tpu.dot_dimension_numbers<[1], [0], [0], [1], [0, 0, 1, 1], [], []>} : vector<8x64xf32>, vector<64x128xf32>, vector<8x128xf32> -> vector<8x128xf32>
    %c0_3 = arith.constant 0 : index
    %c0_4 = arith.constant 0 : index
    %8 = vector.load %arg3[%c0_3, %c0_4] : memref<8x128xf32, #tpu.memory_space<vmem>>, vector<8x128xf32>
    tpu.vector_store %arg3[%c0_3, %c0_4], %7 {strides = array<i32>} : memref<8x128xf32, #tpu.memory_space<vmem>>, vector<8x128xf32>,
    return
  }
  func.func @transform_0(%arg0: i32) -> (i32, i32) {
    %c0_i32 = arith.constant 0 : i32
    %c0_i32_0 = arith.constant 0 : i32
    return %arg0, %c0_i32 : i32, i32
  }
  func.func @transform_1(%arg0: i32) -> (i32, i32) {
    %c0_i32 = arith.constant 0 : i32
    %c0_i32_0 = arith.constant 0 : i32
    %c0_i32_1 = arith.constant 0 : i32
    return %c0_i32, %c0_i32_0 : i32, i32
  }
  func.func @transform_2(%arg0: i32) -> (i32, i32) {
    %c0_i32 = arith.constant 0 : i32
    %c0_i32_0 = arith.constant 0 : i32
    return %arg0, %c0_i32 : i32, i32
  }
}

</mosaic_0001>

<llo_original>
// kernel: tpu_custom_call.1
$region0: #{tpu_custom_call.1}
  #allocation0 [shape = 'u32[]', space=smem, size = 0x4, offset = 0x4, fixed_abs, tag = 'smem constant byte address 0x4 - core index']
  #allocation1 [shape = 'u32[144,128]{1,0:T(1,128)}', space=vmem, size = 0x12000, scoped, tag = 'internal scratch']
  %s0 = inlined_call_operand.vmem [shape: s32[16,1], index: 0, kind: input, shape index: {}]
  %s1 = inlined_call_operand.hbm [shape: f32[64,128], index: 1, kind: input, shape index: {}]
  %s2 = inlined_call_operand.hbm [shape: f32[16,128], index: 2, kind: output, shape index: {}]
  %s3 = sld [smem:[#allocation0]]
  $region45: #{tpu_custom_call.1} parent=0
    _
  %s5 = ssub.s32 1, %s3
  %s6 = scalar_select 0, %s5, %s3
  $region1: #{tpu_custom_call.1} parent=0
    #allocation2 [shape = 'u8[32768]{0}', space=vmem, size = 0x8000, scoped, tag = 'input window, operand 1, single buffered']
    #allocation3 [shape = 's32[2]{0}', space=sflag, size = 0x8, scoped, tag = 'scoped memory for tpu_custom_call.1']
    #allocation4 [shape = 's32[2]{0}', space=sflag, size = 0x8, scoped, tag = 'scoped memory for tpu_custom_call.1']
    #allocation5 [shape = 'u8[8192]{0}', space=vmem, size = 0x2000, scoped, tag = 'output window, operand 0']
    %7 = vsyncpa [#allocation3], 0
    %8 = vsyncpa [#allocation4], 0
    %s9 = scalar_lea.sflag [#allocation4], 1
    %10 = vsyncpa %s9, 0
    loop: start=0, step=1, limit=4
    $region2: #{tpu_custom_call.1} parent=1 // loop_pre_header
      _
    $region3: #{tpu_custom_call.1} parent=1 // loop_header
      %s12 = sphi 0, %s16
      %p13 = scmp.ge.s32.totalorder %s12, 4
      %s22 = sphi 0, %s24
      %s25 = sphi 0, %s22
      %s26 = sphi 0, %s25
      %s42 = sphi 0, %s26
      %s46 = sphi 0, %s46
      %s48 = sphi 0, %s46
      %s49 = sphi 0, %s48
      %s63 = sphi 0, %s49
      %s69 = sphi 0, %s71
      %s72 = sphi 0, %s69
      %s73 = sphi 0, %s72
      %s89 = sphi 0, %s73
    $region4: #{tpu_custom_call.1} parent=1 // loop_header_branch
      %15 = sbr.rel (%p13) target = $region8
    $region5: #{tpu_custom_call.1} parent=1 // loop_body
      %s17 = ssub.s32 %s12, 1
      %s18 = ssub.s32 %s12, 2
      %s19 = sadd.s32 %s12, 1
      %s20 = ssub.s32 %s12, %s19
      %p21 = scmp.eq.s32.totalorder %s20, 0
      %s23 = sadd.s32 %s22, 1
      %s24 = scalar_select %p21, %s22, %s23
      %p27 = pneg %p21
      %p28 = scmp.eq.s32.totalorder %s12, 1
      %p29 = por %p27, %p28
      %p30 = scmp.ne.s32.totalorder %s22, %s25
      %p31 = scmp.eq.s32.totalorder %s12, 0
      %p32 = por %p30, %p31
      %p33 = scmp.ne.s32.totalorder %s22, %s25
      %p34 = scmp.eq.s32.totalorder %s17, 1
      %p35 = por %p33, %p34
      %p36 = scmp.ne.s32.totalorder %s25, %s26
      %p37 = scmp.eq.s32.totalorder %s17, 0
      %p38 = por %p36, %p37
      %p39 = scmp.ne.s32.totalorder %s25, %s26
      %p40 = scmp.eq.s32.totalorder %s18, 1
      %p41 = por %p39, %p40
      %p43 = scmp.ne.s32.totalorder %s26, %s42
      %p44 = scmp.eq.s32.totalorder %s18, 0
      %p45 = por %p43, %p44
      %s47 = sadd.s32 %s46, 1
      %p50 = scmp.eq.s32.totalorder %s12, 1
      %p51 = scmp.ne.s32.totalorder %s46, %s48
      %p52 = scmp.eq.s32.totalorder %s12, 0
      %p53 = por %p51, %p52
      %p54 = scmp.ne.s32.totalorder %s46, %s48
      %p55 = scmp.eq.s32.totalorder %s17, 1
      %p56 = por %p54, %p55
      %p57 = scmp.ne.s32.totalorder %s48, %s49
      %p58 = scmp.eq.s32.totalorder %s17, 0
      %p59 = por %p57, %p58
      %p60 = scmp.ne.s32.totalorder %s48, %s49
      %p61 = scmp.eq.s32.totalorder %s18, 1
      %p62 = por %p60, %p61
      %p64 = scmp.ne.s32.totalorder %s49, %s63
      %p65 = scmp.eq.s32.totalorder %s18, 0
      %p66 = por %p64, %p65
      %s67 = ssub.s32 %s12, %s19
      %p68 = scmp.eq.s32.totalorder %s67, 0
      %s70 = sadd.s32 %s69, 1
      %s71 = scalar_select %p68, %s69, %s70
      %p74 = pneg %p68
      %p75 = scmp.eq.s32.totalorder %s12, 1
      %p76 = por %p74, %p75
      %p77 = scmp.ne.s32.totalorder %s69, %s72
      %p78 = scmp.eq.s32.totalorder %s12, 0
      %p79 = por %p77, %p78
      %p80 = scmp.ne.s32.totalorder %s69, %s72
      %p81 = scmp.eq.s32.totalorder %s17, 1
      %p82 = por %p80, %p81
      %p83 = scmp.ne.s32.totalorder %s72, %s73
      %p84 = scmp.eq.s32.totalorder %s17, 0
      %p85 = por %p83, %p84
      %p86 = scmp.ne.s32.totalorder %s72, %s73
      %p87 = scmp.eq.s32.totalorder %s18, 1
      %p88 = por %p86, %p87
      %p90 = scmp.ne.s32.totalorder %s73, %s89
      %p91 = scmp.eq.s32.totalorder %s18, 0
      %p92 = por %p90, %p91
      %p93 = scmp.le.s32.totalorder 1, %s12
      %p94 = scmp.lt.s32.totalorder %s12, 3
      %p95 = pnand %p93, %p94
      %p96 = pneg %p95
      // Predicated region
      $region9: #{tpu_custom_call.1} parent=5 // pred_check
        _
      $region10: #{tpu_custom_call.1} parent=5 // pred_check_branch
        %98 = sbr.rel (%p95) target = $region12
      $region11: #{tpu_custom_call.1} parent=5 // pred_region
        %s99 = ssub.s32 %s12, 1
        // Predicated region
        $region13: #{tpu_custom_call.1} parent=11 // pred_check
          %p100 = pneg %p59
        $region14: #{tpu_custom_call.1} parent=11 // pred_check_branch
          %102 = sbr.rel (%p100) target = $region16
        $region15: #{tpu_custom_call.1} parent=11 // pred_region
          %s104 = ssub.s32 1024, 1024
          %105 = vsyncadd [#allocation3], %s104
          %s106 = sshll.u32 [#allocation2], 4
          %s107 = int_to_ptr.vmem [resolvable:$true] %s106
          %112 = dma.hbm_to_vmem [thread:$0]  %s1, 1024, %s107, [#allocation3], 128, 128, 8
        $region16: #{tpu_custom_call.1} parent=11 // pred_fallthru
          _
      $region12: #{tpu_custom_call.1} parent=5 // pred_fallthru
        _
      %p113 = scmp.lt.s32.totalorder %s12, 2
      // Predicated region
      $region17: #{tpu_custom_call.1} parent=5 // pred_check
        %p114 = pneg %p113
      $region18: #{tpu_custom_call.1} parent=5 // pred_check_branch
        %116 = sbr.rel (%p114) target = $region20
      $region19: #{tpu_custom_call.1} parent=5 // pred_region
        // Predicated region
        $region21: #{tpu_custom_call.1} parent=19 // pred_check
          %p117 = pneg %p32
        $region22: #{tpu_custom_call.1} parent=19 // pred_check_branch
          %119 = sbr.rel (%p117) target = $region24
        $region23: #{tpu_custom_call.1} parent=19 // pred_region
          %p120 = scmp.lt.s32.totalorder %s12, 1
          %s121 = scalar_select %p120, %s12, 1
          %s122 = smul.addr %s121, 8
          %s123 = scalar_lea.vmem %s0, %s122
        $region24: #{tpu_custom_call.1} parent=19 // pred_fallthru
          _
      $region20: #{tpu_custom_call.1} parent=5 // pred_fallthru
        _
      %p124 = scmp.le.s32.totalorder 1, %s12
      %p125 = scmp.lt.s32.totalorder %s12, 3
      %p126 = pnand %p124, %p125
      %p127 = pneg %p126
      // Predicated region
      $region25: #{tpu_custom_call.1} parent=5 // pred_check
        _
      $region26: #{tpu_custom_call.1} parent=5 // pred_check_branch
        %129 = sbr.rel (%p126) target = $region28
      $region27: #{tpu_custom_call.1} parent=5 // pred_region
        %s130 = ssub.s32 %s12, 1
        // Predicated region
        $region29: #{tpu_custom_call.1} parent=27 // pred_check
          %p131 = pneg %p59
        $region30: #{tpu_custom_call.1} parent=27 // pred_check_branch
          %133 = sbr.rel (%p131) target = $region32
        $region31: #{tpu_custom_call.1} parent=27 // pred_region
          %134 = dma.done [#allocation3], 1024
        $region32: #{tpu_custom_call.1} parent=27 // pred_fallthru
          _
        %p135 = scmp.lt.s32.totalorder %s17, 1
        %s136 = scalar_select %p135, %s17, 1
        %s137 = smul.addr %s136, 8
        %s138 = scalar_lea.vmem %s0, %s137
        %p139 = pneg %p38
        %p140 = pneg %p35
        %p141 = pneg %p59
        %p142 = pneg %p56
        %p143 = pneg %p85
        %p144 = pneg %p82
        %s145 = sand.u32 %s72, 1
        %s146 = scalar_lea.sflag [#allocation4], %s145
        %s147 = sand.u32 %s72, 1
        %s148 = smul.addr %s147, 8
        %s149 = scalar_lea.vmem [#allocation5], %s148
        %p150 = scmp.lt.s32.totalorder %s17, 1
        %s151 = scalar_select %p150, %s17, 1
        %s152 = smul.addr %s151, 8
        %s153 = scalar_lea.vmem %s0, %s152
        %v154 = vld [vmem:[%s153] sm:$0xff]
        %v155 = vlaneseq
        %v156 = vand.u32 %v155, 127
        %157 = vset.pattern.permute.xlu0 0
        %158 = vperm.xlu0 %157, %v154
        %v159 = vpop.permute.xlu0 %158
        %vm160 = vcmp.eq.s32.totalorder %v159, %v156
        %v161 = vsel %vm160, 1, 0
        %v162 = vcvt.s32.f32 %v161
        %v163 = vld [vmem:[#allocation2] sm:$0xff]
        %v164 = vld [vmem:[#allocation2 + $0x8] sm:$0xff]
        %v165 = vld [vmem:[#allocation2 + $0x10] sm:$0xff]
        %v166 = vld [vmem:[#allocation2 + $0x18] sm:$0xff]
        %v167 = vld [vmem:[#allocation2 + $0x20] sm:$0xff]
        %v168 = vld [vmem:[#allocation2 + $0x28] sm:$0xff]
        %v169 = vld [vmem:[#allocation2 + $0x30] sm:$0xff]
        %v170 = vld [vmem:[#allocation2 + $0x38] sm:$0xff]
        %vm171 = vcmask 523264
        %v173 = vsel %vm171, %v162, 0
        %175 = vmatprep.subr.mxu0 0.0
        %176 = vmatpush1.msra.mxu0 %v163
        %177 = vmatprep.subr.mxu0 0.0
        %178 = vmatpush1.msra.mxu0 %v164
        %179 = vmatprep.subr.mxu0 0.0
        %180 = vmatpush1.msra.mxu0 %v165
        %181 = vmatprep.subr.mxu0 0.0
        %182 = vmatpush1.msra.mxu0 %v166
        %183 = vmatprep.subr.mxu0 0.0
        %184 = vmatpush1.msra.mxu0 %v167
        %185 = vmatprep.subr.mxu0 0.0
        %186 = vmatpush1.msra.mxu0 %v168
        %187 = vmatprep.subr.mxu0 0.0
        %188 = vmatpush1.msra.mxu0 %v169
        %189 = vmatprep.subr.mxu0 0.0
        %190 = vmatpush1.msra.mxu0 %v170
        %191 = vmatprep.subr.mxu0 0.0
        %192 = vmatpush1.msra.mxu0 0.0
        %193 = vmatprep.subr.mxu0 0.0
        %194 = vmatpush1.msra.mxu0 0.0
        %195 = vmatprep.subr.mxu0 0.0
        %196 = vmatpush1.msra.mxu0 0.0
        %197 = vmatprep.subr.mxu0 0.0
        %198 = vmatpush1.msra.mxu0 0.0
        %199 = vmatprep.subr.mxu0 0.0
        %200 = vmatpush1.msra.mxu0 0.0
        %201 = vmatprep.subr.mxu0 0.0
        %202 = vmatpush1.msra.mxu0 0.0
        %203 = vmatprep.subr.mxu0 0.0
        %204 = vmatpush1.msra.mxu0 0.0
        %205 = vmatprep.subr.mxu0 0.0
        %206 = vmatpush1.msra.mxu0 0.0
        %207 = vmatprep.subr.mxu0 0.0
        %208 = vmatpush1.msra.mxu0 0.0
        %209 = vmatprep.subr.mxu0 0.0
        %210 = vmatpush1.msra.mxu0 0.0
        %211 = vmatprep.subr.mxu0 0.0
        %212 = vmatpush1.msra.mxu0 0.0
        %213 = vmatprep.subr.mxu0 0.0
        %214 = vmatpush1.msra.mxu0 0.0
        %215 = vmatprep.subr.mxu0 0.0
        %216 = vmatpush1.msra.mxu0 0.0
        %217 = vmatprep.subr.mxu0 0.0
        %218 = vmatpush1.msra.mxu0 0.0
        %219 = vmatprep.subr.mxu0 0.0
        %220 = vmatpush1.msra.mxu0 0.0
        %221 = vmatprep.subr.mxu0 0.0
        %222 = vmatpush1.msra.mxu0 0.0
        %223 = vmatprep.subr.mxu0 0.0
        %224 = vmatpush1.msra.mxu0 0.0
        %225 = vmatprep.subr.mxu0 0.0
        %226 = vmatpush1.msra.mxu0 0.0
        %227 = vmatprep.subr.mxu0 0.0
        %228 = vmatpush1.msra.mxu0 0.0
        %229 = vmatprep.subr.mxu0 0.0
        %230 = vmatpush1.msra.mxu0 0.0
        %231 = vmatprep.subr.mxu0 0.0
        %232 = vmatpush1.msra.mxu0 0.0
        %233 = vmatprep.subr.mxu0 0.0
        %234 = vmatpush1.msra.mxu0 0.0
        %235 = vmatprep.subr.mxu0 0.0
        %236 = vmatpush1.msra.mxu0 0.0
        %237 = vmatprep.subr.mxu0 0.0
        %238 = vmatpush1.msra.mxu0 0.0
        %239 = vmatprep.mubr.f32.mxu0 0.0
        %240 = vmatmul.mubr.f32.gmra.mrb[0].mxu0 %v173
        %v241 = vpop.f32.mrb[0].mxu0
        %v242 = vadd.f32 0.0, %v241
        %v243 = vpop.f32.mrb[0].mxu0
        %244 = vdwg.mxu0
        %245 = vst [vmem:[%s149] sm:$0xff] %v242
        %s246 = sand.u32 %s72, 1
        %s247 = scalar_lea.sflag [#allocation4], %s246
        %s248 = sand.u32 %s72, 1
        %s249 = smul.addr %s248, 8
        %s250 = scalar_lea.vmem [#allocation5], %s249
        // Predicated region
        $region33: #{tpu_custom_call.1} parent=27 // pred_check
          %p251 = pneg %p82
        $region34: #{tpu_custom_call.1} parent=27 // pred_check_branch
          %253 = sbr.rel (%p251) target = $region36
        $region35: #{tpu_custom_call.1} parent=27 // pred_region
          %s255 = ssub.s32 128, 128
          %256 = vsyncadd %s247, %s255
          %s257 = smul.addr %s17, 128
          %s258 = scalar_lea.hbm %s2, %s257
          %s260 = sshll.u32 %s250, 4
          %s261 = int_to_ptr.vmem [resolvable:$true] %s260
          %263 = dma.vmem_to_hbm [thread:$0]  %s261, 128, %s258, %s247
        $region36: #{tpu_custom_call.1} parent=27 // pred_fallthru
          _
      $region28: #{tpu_custom_call.1} parent=5 // pred_fallthru
        _
      %p264 = scmp.le.s32.totalorder 2, %s12
      // Predicated region
      $region37: #{tpu_custom_call.1} parent=5 // pred_check
        %p265 = pneg %p264
      $region38: #{tpu_custom_call.1} parent=5 // pred_check_branch
        %267 = sbr.rel (%p265) target = $region40
      $region39: #{tpu_custom_call.1} parent=5 // pred_region
        %s268 = ssub.s32 %s12, 2
        // Predicated region
        $region41: #{tpu_custom_call.1} parent=39 // pred_check
          %p269 = pneg %p88
        $region42: #{tpu_custom_call.1} parent=39 // pred_check_branch
          %271 = sbr.rel (%p269) target = $region44
        $region43: #{tpu_custom_call.1} parent=39 // pred_region
          %s272 = sand.u32 %s73, 1
          %s273 = scalar_lea.sflag [#allocation4], %s272
          %s274 = sand.u32 %s73, 1
          %s275 = smul.addr %s274, 8
          %s276 = scalar_lea.vmem [#allocation5], %s275
          %277 = dma.done %s273, 128
        $region44: #{tpu_custom_call.1} parent=39 // pred_fallthru
          _
      $region40: #{tpu_custom_call.1} parent=5 // pred_fallthru
        _
    $region6: #{tpu_custom_call.1} parent=1 // loop_footer
      %s16 = sadd.s32 1, %s12
    $region7: #{tpu_custom_call.1} parent=1 // loop_footer_branch
      %11 = sbr.rel target = $region3
    $region8: #{tpu_custom_call.1} parent=1 // loop_exit
      _
    %278 = vsyncpa [#allocation3], 1
    %s279 = scalar_lea.sflag [#allocation3], 1
    %280 = vsyncpa %s279, 1
    %281 = vsyncpa [#allocation4], 1
    %s282 = scalar_lea.sflag [#allocation4], 1
    %283 = vsyncpa %s282, 1

</llo_original>
